<compile_context>
chip_gen: v7x
topology: tpu7x:2x2x1
jax: 0.10.0
libtpu: 0.0.40
codegen_flags: <defaults>
</compile_context>

<pallas_src>
import functools

import jax
import jax.numpy as jnp
from jax.experimental import pallas as pl
from jax.experimental.pallas import tpu as pltpu


def _round_up(x, m):
    return (x + m - 1) // m * m


def _patch_embed_kernel(x_ref, w_ref, b_ref, o_ref):
    # (TM, K) bf16 @ (K, E) bf16 -> f32 accumulate on the MXU, bias add on VPU.
    acc = jnp.dot(x_ref[...], w_ref[...], preferred_element_type=jnp.float32)
    o_ref[...] = (acc + b_ref[...]).astype(o_ref.dtype)


@functools.partial(jax.jit, static_argnames=("patch_size",))
def patch_embed_forward(x, weight, bias, patch_size):
    """x: (B, C, H, W) f32; weight: (E, C, P, P); bias: (E,) -> (B, N, E) f32."""
    B, C, H, W = x.shape
    E = weight.shape[0]
    P = patch_size
    assert H % P == 0 and W % P == 0, "H/W must be divisible by patch_size"
    nH, nW = H // P, W // P
    N = nH * nW
    K = C * P * P
    M = B * N

    # --- tile sizes (v7x-safe defaults; sublane/lane aligned) ---
    TM = min(512, _round_up(M, 8))          # rows per grid step
    M_pad = _round_up(M, TM)
    K_pad = _round_up(K, 128)               # contraction dim, lane aligned
    E_pad = _round_up(E, 128)               # lane-dense output (no masked vst)
    grid_m = M_pad // TM

    # --- glue: extract non-overlapping patches, flatten in (C, Ph, Pw) order ---
    xp = x.reshape(B, C, nH, P, nW, P)
    xp = jnp.transpose(xp, (0, 2, 4, 1, 3, 5)).reshape(M, K)
    xp = xp.astype(jnp.bfloat16)
    if (M_pad, K_pad) != (M, K):
        xp = jnp.pad(xp, ((0, M_pad - M), (0, K_pad - K)))

    w_flat = weight.reshape(E, K).T.astype(jnp.bfloat16)      # (K, E)
    if (K_pad, E_pad) != (K, E):
        w_flat = jnp.pad(w_flat, ((0, K_pad - K), (0, E_pad - E)))

    b_row = bias.reshape(1, E).astype(jnp.float32)            # (1, E)
    if E_pad != E:
        b_row = jnp.pad(b_row, ((0, 0), (0, E_pad - E)))

    # --- VMEM budget (double-buffered tiles + resident weights) + scheduler hint ---
    vmem_bytes = 2 * (TM * K_pad * 2          # x tile, bf16
                      + K_pad * E_pad * 2     # weights, bf16
                      + E_pad * 4             # bias, f32
                      + TM * E_pad * 4)       # out tile, f32
    vmem_limit = int(min(max(vmem_bytes + (4 << 20), 32 << 20), 100 << 20))

    cost = pl.CostEstimate(
        flops=2 * M_pad * K_pad * E_pad,
        transcendentals=0,
        bytes_accessed=(M_pad * K_pad * 2 + K_pad * E_pad * 2
                        + E_pad * 4 + M_pad * E_pad * 4),
    )

    out = pl.pallas_call(
        _patch_embed_kernel,
        out_shape=jax.ShapeDtypeStruct((M_pad, E_pad), x.dtype),
        grid_spec=pltpu.PrefetchScalarGridSpec(
            num_scalar_prefetch=0,
            grid=(grid_m,),
            in_specs=[
                pl.BlockSpec((TM, K_pad), lambda i: (i, 0)),       # x tile
                pl.BlockSpec((K_pad, E_pad), lambda i: (0, 0)),    # resident W
                pl.BlockSpec((1, E_pad), lambda i: (0, 0)),        # resident bias
            ],
            out_specs=pl.BlockSpec((TM, E_pad), lambda i: (i, 0)),
        ),
        compiler_params=pltpu.CompilerParams(
            dimension_semantics=("parallel",),
            vmem_limit_bytes=vmem_limit,
            # Let XLA fuse the patch reshape/transpose/cast into the x operand
            # instead of materializing x_patches in HBM first.
            allow_input_fusion=[True, False, False],
        ),
        cost_estimate=cost,
    )(xp, w_flat, b_row)

    return out[:M, :E].reshape(B, N, E)       # (B, num_patches, embed_dim)


def reference_forward(x, weight, bias, patch_size):
    """Plain-JAX reference matching torch Conv2d(stride=kernel) semantics."""
    y = jax.lax.conv_general_dilated(
        x, weight,
        window_strides=(patch_size, patch_size),
        padding="VALID",
        dimension_numbers=("NCHW", "OIHW", "NCHW"),
    ) + bias[None, :, None, None]
    B, E, nH, nW = y.shape
    return jnp.transpose(y.reshape(B, E, nH * nW), (0, 2, 1))


if __name__ == "__main__":
    # Small shapes consistent with the module: img=16, patch=8, in_chans=4, embed=32
    B, C, H, W = 2, 4, 16, 16
    P = 8
    E = 32

    key = jax.random.PRNGKey(0)
    kx, kw, kb = jax.random.split(key, 3)
    x = jax.random.normal(kx, (B, C, H, W), dtype=jnp.float32)
    weight = jax.random.normal(kw, (E, C, P, P), dtype=jnp.float32) * 0.02
    bias = jax.random.normal(kb, (E,), dtype=jnp.float32) * 0.02

    y = jax.block_until_ready(patch_embed_forward(x, weight, bias, P))
    y_ref = jax.block_until_ready(reference_forward(x, weight, bias, P))

    assert y.shape == (B, (H // P) * (W // P), E), y.shape
    # bf16 MXU inputs with f32 accumulation -> relaxed tolerance vs f32 reference.
    assert jnp.allclose(y, y_ref, atol=5e-2, rtol=5e-2), "mismatch vs reference"

    print("KERNEL_OK")
</pallas_src>

<mosaic_0001>
module attributes {stable_mosaic.version = 11 : i64} {
  func.func @_patch_embed_kernel(%arg0: i32, %arg1: memref<8x256xbf16, #tpu.memory_space<vmem>>, %arg2: memref<256x128xbf16, #tpu.memory_space<vmem>>, %arg3: memref<1x128xf32, #tpu.memory_space<vmem>>, %arg4: memref<8x128xf32, #tpu.memory_space<vmem>>) attributes {dimension_semantics = [#tpu.dimension_semantics<parallel>], iteration_bounds = array<i64: 1>, scalar_prefetch = 0 : i64, scratch_operands = 0 : i64, tpu.core_type = #tpu.core_type<tc>, window_params = [{transform_indices = @transform_0, window_bounds = array<i64: 8, 256>}, {pipeline_mode = #tpu.pipeline_mode<synchronous>, transform_indices = @transform_1, window_bounds = array<i64: 256, 128>}, {pipeline_mode = #tpu.pipeline_mode<synchronous>, transform_indices = @transform_2, window_bounds = array<i64: 1, 128>}, {transform_indices = @transform_3, window_bounds = array<i64: 8, 128>}]} {
    %c0 = arith.constant 0 : index
    %c0_0 = arith.constant 0 : index
    %0 = vector.load %arg1[%c0, %c0_0] : memref<8x256xbf16, #tpu.memory_space<vmem>>, vector<8x256xbf16>
    %c0_1 = arith.constant 0 : index
    %c0_2 = arith.constant 0 : index
    %1 = vector.load %arg2[%c0_1, %c0_2] : memref<256x128xbf16, #tpu.memory_space<vmem>>, vector<256x128xbf16>
    %cst = arith.constant dense<0.000000e+00> : vector<8x128xf32>
    %2 = tpu.matmul %0, %1, %cst {dimension_numbers = #tpu.dot_dimension_numbers<[1], [0], [0], [1], [0, 0, 1, 1], [], []>} : vector<8x256xbf16>, vector<256x128xbf16>, vector<8x128xf32> -> vector<8x128xf32>
    %c0_3 = arith.constant 0 : index
    %c0_4 = arith.constant 0 : index
    %3 = vector.load %arg3[%c0_3, %c0_4] : memref<1x128xf32, #tpu.memory_space<vmem>>, vector<1x128xf32>
    %4 = vector.broadcast %3 : vector<1x128xf32> to vector<8x128xf32>
    %5 = arith.addf %2, %4 : vector<8x128xf32>
    %c0_5 = arith.constant 0 : index
    %c0_6 = arith.constant 0 : index
    %6 = vector.load %arg4[%c0_5, %c0_6] : memref<8x128xf32, #tpu.memory_space<vmem>>, vector<8x128xf32>
    tpu.vector_store %arg4[%c0_5, %c0_6], %5 {strides = array<i32>} : memref<8x128xf32, #tpu.memory_space<vmem>>, vector<8x128xf32>,
    return
  }
  func.func @transform_0(%arg0: i32) -> (i32, i32) {
    %c0_i32 = arith.constant 0 : i32
    %c0_i32_0 = arith.constant 0 : i32
    return %arg0, %c0_i32 : i32, i32
  }
  func.func @transform_1(%arg0: i32) -> (i32, i32) {
    %c0_i32 = arith.constant 0 : i32
    %c0_i32_0 = arith.constant 0 : i32
    %c0_i32_1 = arith.constant 0 : i32
    return %c0_i32, %c0_i32_0 : i32, i32
  }
  func.func @transform_2(%arg0: i32) -> (i32, i32) {
    %c0_i32 = arith.constant 0 : i32
    %c0_i32_0 = arith.constant 0 : i32
    %c0_i32_1 = arith.constant 0 : i32
    return %c0_i32, %c0_i32_0 : i32, i32
  }
  func.func @transform_3(%arg0: i32) -> (i32, i32) {
    %c0_i32 = arith.constant 0 : i32
    %c0_i32_0 = arith.constant 0 : i32
    return %arg0, %c0_i32 : i32, i32
  }
}

</mosaic_0001>

<llo_original>
// kernel: patch_embed_forward.1
$region0: #{patch_embed_forward.1}
  #allocation0 [shape = 'u32[]', space=smem, size = 0x4, offset = 0x4, fixed_abs, tag = 'smem constant byte address 0x4 - core index']
  #allocation1 [shape = 'u32[144,128]{1,0:T(1,128)}', space=vmem, size = 0x12000, scoped, tag = 'internal scratch']
  %s0 = inlined_call_operand.vmem [shape: bf16[8,256], index: 0, kind: input, shape index: {}]
  %s1 = inlined_call_operand.vmem [shape: bf16[256,128], index: 1, kind: input, shape index: {}]
  %s2 = inlined_call_operand.vmem [shape: f32[1,128], index: 2, kind: input, shape index: {}]
  %s3 = inlined_call_operand.hbm [shape: f32[8,128], index: 3, kind: output, shape index: {}]
  %s4 = sld [smem:[#allocation0]]
  $region22: #{patch_embed_forward.1} parent=0
    _
  %s6 = ssub.s32 1, %s4
  %s7 = scalar_select 0, %s6, %s4
  $region1: #{patch_embed_forward.1} parent=0
    #allocation2 [shape = 'u8[4096]{0}', space=vmem, size = 0x1000, scoped, tag = 'output window, operand 0, single buffered']
    #allocation3 [shape = 's32[1]{0}', space=sflag, size = 0x4, scoped, tag = 'scoped memory for patch_embed_forward.1']
    %8 = vsyncpa [#allocation3], 0
    // Predicated region
    $region2: #{patch_embed_forward.1} parent=1 // pred_check
      _
    $region3: #{patch_embed_forward.1} parent=1 // pred_check_branch
      %10 = sbr.rel (0) target = $region5
    $region4: #{patch_embed_forward.1} parent=1 // pred_region
      _
    $region5: #{patch_embed_forward.1} parent=1 // pred_fallthru
      _
    // Predicated region
    $region6: #{patch_embed_forward.1} parent=1 // pred_check
      _
    $region7: #{patch_embed_forward.1} parent=1 // pred_check_branch
      %12 = sbr.rel (0) target = $region9
    $region8: #{patch_embed_forward.1} parent=1 // pred_region
      _
    $region9: #{patch_embed_forward.1} parent=1 // pred_fallthru
      _
    // Predicated region
    $region10: #{patch_embed_forward.1} parent=1 // pred_check
      _
    $region11: #{patch_embed_forward.1} parent=1 // pred_check_branch
      %14 = sbr.rel (0) target = $region13
    $region12: #{patch_embed_forward.1} parent=1 // pred_region
      _
    $region13: #{patch_embed_forward.1} parent=1 // pred_fallthru
      _
    %v16 = vld [vmem:[%s0] sm:$0xff]
    %v17 = vld [vmem:[%s1] sm:$0xf]
    %v18 = vld [vmem:[%s1 + $0x4] sm:$0xf]
    %v19 = vld [vmem:[%s1 + $0x8] sm:$0xf]
    %v20 = vld [vmem:[%s1 + $0xc] sm:$0xf]
    %v21 = vld [vmem:[%s1 + $0x10] sm:$0xf]
    %v22 = vld [vmem:[%s1 + $0x14] sm:$0xf]
    %v23 = vld [vmem:[%s1 + $0x18] sm:$0xf]
    %v24 = vld [vmem:[%s1 + $0x1c] sm:$0xf]
    %v25 = vld [vmem:[%s1 + $0x20] sm:$0xf]
    %v26 = vld [vmem:[%s1 + $0x24] sm:$0xf]
    %v27 = vld [vmem:[%s1 + $0x28] sm:$0xf]
    %v28 = vld [vmem:[%s1 + $0x2c] sm:$0xf]
    %v29 = vld [vmem:[%s1 + $0x30] sm:$0xf]
    %v30 = vld [vmem:[%s1 + $0x34] sm:$0xf]
    %v31 = vld [vmem:[%s1 + $0x38] sm:$0xf]
    %v32 = vld [vmem:[%s1 + $0x3c] sm:$0xf]
    %v33 = vld [vmem:[%s1 + $0x40] sm:$0xf]
    %v34 = vld [vmem:[%s1 + $0x44] sm:$0xf]
    %v35 = vld [vmem:[%s1 + $0x48] sm:$0xf]
    %v36 = vld [vmem:[%s1 + $0x4c] sm:$0xf]
    %v37 = vld [vmem:[%s1 + $0x50] sm:$0xf]
    %v38 = vld [vmem:[%s1 + $0x54] sm:$0xf]
    %v39 = vld [vmem:[%s1 + $0x58] sm:$0xf]
    %v40 = vld [vmem:[%s1 + $0x5c] sm:$0xf]
    %v41 = vld [vmem:[%s1 + $0x60] sm:$0xf]
    %v42 = vld [vmem:[%s1 + $0x64] sm:$0xf]
    %v43 = vld [vmem:[%s1 + $0x68] sm:$0xf]
    %v44 = vld [vmem:[%s1 + $0x6c] sm:$0xf]
    %v45 = vld [vmem:[%s1 + $0x70] sm:$0xf]
    %v46 = vld [vmem:[%s1 + $0x74] sm:$0xf]
    %v47 = vld [vmem:[%s1 + $0x78] sm:$0xf]
    %v48 = vld [vmem:[%s1 + $0x7c] sm:$0xf]
    %v49 = vld [vmem:[%s2] sm:$0x1]
    %v51 = vlaneseq
    %v52 = vshrl.u32 %v51, 7
    %v53 = vsub.s32 0, %v52
    %v54 = vrot.slane %v49, %v53
    %v57 = vunpack.c.l.b16 %v16
    %v58 = vunpack.c.h.b16 %v16
    %v59 = vpack.c.b16 %v57, %v57
    %v60 = vpack.c.b16 %v58, %v58
    %v95 = vunpack.c.l.b16 %v17
    %v96 = vunpack.c.l.b16 %v18
    %v97 = vunpack.c.l.b16 %v19
    %v98 = vunpack.c.l.b16 %v20
    %v99 = vunpack.c.l.b16 %v21
    %v100 = vunpack.c.l.b16 %v22
    %v101 = vunpack.c.l.b16 %v23
    %v102 = vunpack.c.l.b16 %v24
    %v103 = vunpack.c.l.b16 %v25
    %v104 = vunpack.c.l.b16 %v26
    %v105 = vunpack.c.l.b16 %v27
    %v106 = vunpack.c.l.b16 %v28
    %v107 = vunpack.c.l.b16 %v29
    %v108 = vunpack.c.l.b16 %v30
    %v109 = vunpack.c.l.b16 %v31
    %v110 = vunpack.c.l.b16 %v32
    %v111 = vunpack.c.l.b16 %v33
    %v112 = vunpack.c.l.b16 %v34
    %v113 = vunpack.c.l.b16 %v35
    %v114 = vunpack.c.l.b16 %v36
    %v115 = vunpack.c.l.b16 %v37
    %v116 = vunpack.c.l.b16 %v38
    %v117 = vunpack.c.l.b16 %v39
    %v118 = vunpack.c.l.b16 %v40
    %v119 = vunpack.c.l.b16 %v41
    %v120 = vunpack.c.l.b16 %v42
    %v121 = vunpack.c.l.b16 %v43
    %v122 = vunpack.c.l.b16 %v44
    %v123 = vunpack.c.l.b16 %v45
    %v124 = vunpack.c.l.b16 %v46
    %v125 = vunpack.c.l.b16 %v47
    %v126 = vunpack.c.l.b16 %v48
    %v127 = vpack.c.b16 %v96, %v95
    %v128 = vpack.c.b16 %v98, %v97
    %v129 = vpack.c.b16 %v100, %v99
    %v130 = vpack.c.b16 %v102, %v101
    %v131 = vpack.c.b16 %v104, %v103
    %v132 = vpack.c.b16 %v106, %v105
    %v133 = vpack.c.b16 %v108, %v107
    %v134 = vpack.c.b16 %v110, %v109
    %v135 = vpack.c.b16 %v112, %v111
    %v136 = vpack.c.b16 %v114, %v113
    %v137 = vpack.c.b16 %v116, %v115
    %v138 = vpack.c.b16 %v118, %v117
    %v139 = vpack.c.b16 %v120, %v119
    %v140 = vpack.c.b16 %v122, %v121
    %v141 = vpack.c.b16 %v124, %v123
    %v142 = vpack.c.b16 %v126, %v125
    %159 = vmatprep.subr.bf16.mxu0 0
    %160 = vmatpush1.bf16.msra.mxu0 %v127
    %161 = vmatprep.subr.bf16.mxu0 0
    %162 = vmatpush1.bf16.msra.mxu0 %v128
    %163 = vmatprep.subr.bf16.mxu0 0
    %164 = vmatpush1.bf16.msra.mxu0 %v129
    %165 = vmatprep.subr.bf16.mxu0 0
    %166 = vmatpush1.bf16.msra.mxu0 %v130
    %167 = vmatprep.subr.bf16.mxu0 0
    %168 = vmatpush1.bf16.msra.mxu0 %v131
    %169 = vmatprep.subr.bf16.mxu0 0
    %170 = vmatpush1.bf16.msra.mxu0 %v132
    %171 = vmatprep.subr.bf16.mxu0 0
    %172 = vmatpush1.bf16.msra.mxu0 %v133
    %173 = vmatprep.subr.bf16.mxu0 0
    %174 = vmatpush1.bf16.msra.mxu0 %v134
    %175 = vmatprep.subr.bf16.mxu0 0
    %176 = vmatpush1.bf16.msra.mxu0 %v135
    %177 = vmatprep.subr.bf16.mxu0 0
    %178 = vmatpush1.bf16.msra.mxu0 %v136
    %179 = vmatprep.subr.bf16.mxu0 0
    %180 = vmatpush1.bf16.msra.mxu0 %v137
    %181 = vmatprep.subr.bf16.mxu0 0
    %182 = vmatpush1.bf16.msra.mxu0 %v138
    %183 = vmatprep.subr.bf16.mxu0 0
    %184 = vmatpush1.bf16.msra.mxu0 %v139
    %185 = vmatprep.subr.bf16.mxu0 0
    %186 = vmatpush1.bf16.msra.mxu0 %v140
    %187 = vmatprep.subr.bf16.mxu0 0
    %188 = vmatpush1.bf16.msra.mxu0 %v141
    %189 = vmatprep.subr.bf16.mxu0 0
    %190 = vmatpush1.bf16.msra.mxu0 %v142
    %191 = vmatprep.mubr.bf16.mxu0 %v60
    %192 = vmatmul.mubr.bf16.gmra.mrb[0].mxu0 %v59
    %v193 = vpop.f32.mrb[0].mxu0
    %v194 = vadd.f32 %v54, %v193
    %v195 = vpop.f32.mrb[0].mxu0
    %v196 = vpop.f32.mrb[0].mxu0
    %v197 = vpop.f32.mrb[0].mxu0
    %198 = vdwg.mxu0
    %199 = vst [vmem:[#allocation2] sm:$0xff] %v194
    // Predicated region
    $region14: #{patch_embed_forward.1} parent=1 // pred_check
      _
    $region15: #{patch_embed_forward.1} parent=1 // pred_check_branch
      %201 = sbr.rel (0) target = $region17
    $region16: #{patch_embed_forward.1} parent=1 // pred_region
      %s203 = ssub.s32 128, 128
      %204 = vsyncadd [#allocation3], %s203
      %s206 = sshll.u32 [#allocation2], 4
      %s207 = int_to_ptr.vmem [resolvable:$true] %s206
      %209 = dma.vmem_to_hbm [thread:$0]  %s207, 128, %s3, [#allocation3]
    $region17: #{patch_embed_forward.1} parent=1 // pred_fallthru
      _
    // Predicated region
    $region18: #{patch_embed_forward.1} parent=1 // pred_check
      _
    $region19: #{patch_embed_forward.1} parent=1 // pred_check_branch
      %211 = sbr.rel (0) target = $region21
    $region20: #{patch_embed_forward.1} parent=1 // pred_region
      %212 = dma.done [#allocation3], 128
    $region21: #{patch_embed_forward.1} parent=1 // pred_fallthru
      _
    %213 = vsyncpa [#allocation3], 1

</llo_original>
